<compile_context>
chip_gen: v7x
topology: tpu7x:2x2x1
jax: 0.10.0
libtpu: 0.0.40
codegen_flags: <defaults>
</compile_context>

<pallas_src>
import jax
import jax.numpy as jnp
from jax import lax
from jax.experimental import pallas as pl
from jax.experimental.pallas import tpu as pltpu

IN_DIM = 5
HID_DIM = 10
OUT_DIM = 5

_LANE = 128
_TB_MIN = 4096    # below this, per-grid-step overhead dominates the tile's DMA
_TB_MAX = 32768   # above this, the lane-padded (TB, 5) x block blows the VMEM budget


def _round_up(n, m):
    return ((n + m - 1) // m) * m


def _vmem_bytes(tb):
    """Explicit VMEM budget for one grid step (double-buffered pipeline)."""
    x_blk = 2 * tb * 128 * 4   # (TB, 5) f32: lanes pad 5 -> 128, double-buffered
    o_blk = 2 * 8 * tb * 4     # (5 -> 8, TB) f32 output block, double-buffered
    h_tmp = 16 * tb * 4        # (10 -> 16, TB) f32 hidden intermediate
    return x_blk + o_blk + h_tmp + (2 << 20)   # weights/biases/compiler slack


def _pick_tile(batch, block_b):
    b_lanes = _round_up(batch, _LANE)
    tb = min(int(block_b), b_lanes, _TB_MAX)
    tb = _round_up(max(tb, 1), _LANE)
    # Guard against pathologically small caller-supplied tiles.
    tb = max(tb, min(_TB_MIN, b_lanes))
    n_tiles = pl.cdiv(batch, tb)
    # v7x megacore: keep the tile count even (>= 2) so both TensorCores get work.
    if n_tiles > 1 and n_tiles % 2 == 1:
        tb = _round_up(pl.cdiv(batch, n_tiles + 1), _LANE)
        n_tiles = pl.cdiv(batch, tb)
    return tb, n_tiles


def mlp_kernel(x_ref, w1_ref, b1_ref, w2_ref, b2_ref, o_ref):
    """One batch tile.

    x_ref : (TB, IN_DIM)       native batch-major input tile
    w1_ref: (HID_DIM, IN_DIM)  PyTorch layout
    b1_ref: (HID_DIM, 1)
    w2_ref: (OUT_DIM, HID_DIM)
    b2_ref: (OUT_DIM, 1)
    o_ref : (OUT_DIM, TB)      lane-dense output (full-width stores)
    """
    # W1 @ x^T without materializing x^T: contract the trailing feature dims
    # (trans-RHS on the MXU).  Result is lane-dense (HID_DIM, TB).
    h = lax.dot_general(
        w1_ref[...], x_ref[...],
        dimension_numbers=(((1,), (1,)), ((), ())),
        preferred_element_type=jnp.float32)
    h = jnp.maximum(h + b1_ref[...], 0.0)
    y = jnp.dot(w2_ref[...], h, preferred_element_type=jnp.float32)
    o_ref[...] = (y + b2_ref[...]).astype(o_ref.dtype)


def _classifier_forward_xla(x, w1, b1, w2, b2):
    h = jnp.maximum(x @ w1.T + b1.reshape(1, -1), 0.0)
    return h @ w2.T + b2.reshape(1, -1)


def classifier_forward(x, w1, b1, w2, b2, *, block_b=_TB_MAX,
                       force_pallas=False, feature_major_output=False):
    """relu(x @ W1.T + b1) @ W2.T + b2 for x of shape (B, IN_DIM).

    Returns (B, OUT_DIM) like the PyTorch module, or (OUT_DIM, B) if
    feature_major_output=True (skips the final layout pass).
    """
    B = x.shape[0]

    # Tiny batches: launch/DMA-descriptor overhead dominates; XLA's fused GEMMs win.
    # TODO(synk): re-derive this crossover from a benchmark sweep (B in {512, 2048, 8192}).
    if B < 1024 and not force_pallas:
        y = _classifier_forward_xla(x, w1, b1, w2, b2)
        return y.T if feature_major_output else y

    tb, n_tiles = _pick_tile(B, block_b)

    b1_col = b1.reshape(HID_DIM, 1)
    b2_col = b2.reshape(OUT_DIM, 1)

    flops = 2 * B * (IN_DIM * HID_DIM + HID_DIM * OUT_DIM)
    bytes_accessed = 4 * (B * (IN_DIM + OUT_DIM)
                          + HID_DIM * IN_DIM + OUT_DIM * HID_DIM + HID_DIM + OUT_DIM)

    out_fm = pl.pallas_call(
        mlp_kernel,
        out_shape=jax.ShapeDtypeStruct((OUT_DIM, B), x.dtype),
        grid_spec=pltpu.PrefetchScalarGridSpec(
            num_scalar_prefetch=0,
            grid=(n_tiles,),
            in_specs=[
                # x marches along batch (sublanes): one contiguous 4*IN_DIM*TB-byte
                # DMA per tile, pipelined/double-buffered.
                pl.BlockSpec((tb, IN_DIM), lambda i: (i, 0)),
                # Weights/biases: constant block index -> VMEM-resident, no re-DMA.
                pl.BlockSpec((HID_DIM, IN_DIM), lambda i: (0, 0)),
                pl.BlockSpec((HID_DIM, 1), lambda i: (0, 0)),
                pl.BlockSpec((OUT_DIM, HID_DIM), lambda i: (0, 0)),
                pl.BlockSpec((OUT_DIM, 1), lambda i: (0, 0)),
            ],
            out_specs=pl.BlockSpec((OUT_DIM, tb), lambda i: (0, i)),
        ),
        compiler_params=pltpu.CompilerParams(
            # Batch tiles are independent -> megacore sharding on v7x.
            dimension_semantics=("parallel",),
            vmem_limit_bytes=int(min(max(_vmem_bytes(tb), 16 << 20), 48 << 20)),
        ),
        cost_estimate=pl.CostEstimate(
            flops=flops, transcendentals=0, bytes_accessed=bytes_accessed),
    )(x, w1, b1_col, w2, b2_col)

    if feature_major_output:
        return out_fm                     # (OUT_DIM, B): zero extra layout passes
    # Single layout pass to honor the PyTorch (B, OUT_DIM) contract.
    return out_fm.T


def init_params(key):
    # Deterministic init mimicking nn.Linear's uniform(-1/sqrt(fan_in), 1/sqrt(fan_in)).
    k1, k2, k3, k4 = jax.random.split(key, 4)
    bound1 = 1.0 / (IN_DIM ** 0.5)
    bound2 = 1.0 / (HID_DIM ** 0.5)
    w1 = jax.random.uniform(k1, (HID_DIM, IN_DIM), jnp.float32, -bound1, bound1)
    b1 = jax.random.uniform(k2, (HID_DIM,), jnp.float32, -bound1, bound1)
    w2 = jax.random.uniform(k3, (OUT_DIM, HID_DIM), jnp.float32, -bound2, bound2)
    b2 = jax.random.uniform(k4, (OUT_DIM,), jnp.float32, -bound2, bound2)
    return w1, b1, w2, b2


if __name__ == "__main__":
    key = jax.random.PRNGKey(0)
    kx, kp = jax.random.split(key)
    w1, b1, w2, b2 = init_params(kp)

    cases = (
        (128, {}),                   # exact single tile
        (1000, {}),                  # ragged single tile (masked partial writes)
        (9000, {"block_b": 4096}),   # multi-tile, even-split, ragged last tile
    )
    for batch, kw in cases:
        x = jax.random.normal(jax.random.fold_in(kx, batch), (batch, IN_DIM), jnp.float32)
        out = classifier_forward(x, w1, b1, w2, b2, force_pallas=True, **kw)
        jax.block_until_ready(out)
        ref = _classifier_forward_xla(x, w1, b1, w2, b2)
        assert out.shape == (batch, OUT_DIM)
        assert jnp.allclose(out, ref, atol=1e-4, rtol=1e-4)

    # Feature-major output path (skips the final transpose entirely).
    x = jax.random.normal(jax.random.fold_in(kx, 7), (640, IN_DIM), jnp.float32)
    out_fm = classifier_forward(x, w1, b1, w2, b2, force_pallas=True,
                                feature_major_output=True)
    jax.block_until_ready(out_fm)
    assert out_fm.shape == (OUT_DIM, 640)
    assert jnp.allclose(out_fm.T, _classifier_forward_xla(x, w1, b1, w2, b2),
                        atol=1e-4, rtol=1e-4)

    # Small-batch XLA fallback path.
    x_small = jax.random.normal(jax.random.fold_in(kx, 3), (8, IN_DIM), jnp.float32)
    out_small = classifier_forward(x_small, w1, b1, w2, b2)
    jax.block_until_ready(out_small)
    assert out_small.shape == (8, OUT_DIM)

    print("KERNEL_OK")
</pallas_src>

<mosaic_0001>
module attributes {stable_mosaic.version = 11 : i64} {
  func.func @mlp_kernel(%arg0: i32, %arg1: memref<128x5xf32, #tpu.memory_space<vmem>>, %arg2: memref<10x5xf32, #tpu.memory_space<vmem>>, %arg3: memref<10x1xf32, #tpu.memory_space<vmem>>, %arg4: memref<5x10xf32, #tpu.memory_space<vmem>>, %arg5: memref<5x1xf32, #tpu.memory_space<vmem>>, %arg6: memref<5x128xf32, #tpu.memory_space<vmem>>) attributes {dimension_semantics = [#tpu.dimension_semantics<parallel>], iteration_bounds = array<i64: 1>, scalar_prefetch = 0 : i64, scratch_operands = 0 : i64, tpu.core_type = #tpu.core_type<tc>, window_params = [{transform_indices = @transform_0, window_bounds = array<i64: 128, 5>}, {pipeline_mode = #tpu.pipeline_mode<synchronous>, transform_indices = @transform_1, window_bounds = array<i64: 10, 5>}, {pipeline_mode = #tpu.pipeline_mode<synchronous>, transform_indices = @transform_2, window_bounds = array<i64: 10, 1>}, {pipeline_mode = #tpu.pipeline_mode<synchronous>, transform_indices = @transform_3, window_bounds = array<i64: 5, 10>}, {pipeline_mode = #tpu.pipeline_mode<synchronous>, transform_indices = @transform_4, window_bounds = array<i64: 5, 1>}, {transform_indices = @transform_5, window_bounds = array<i64: 5, 128>}]} {
    %c0 = arith.constant 0 : index
    %c0_0 = arith.constant 0 : index
    %0 = vector.load %arg2[%c0, %c0_0] : memref<10x5xf32, #tpu.memory_space<vmem>>, vector<10x5xf32>
    %c0_1 = arith.constant 0 : index
    %c0_2 = arith.constant 0 : index
    %1 = vector.load %arg1[%c0_1, %c0_2] : memref<128x5xf32, #tpu.memory_space<vmem>>, vector<128x5xf32>
    %cst = arith.constant dense<0.000000e+00> : vector<10x128xf32>
    %2 = tpu.matmul %0, %1, %cst {dimension_numbers = #tpu.dot_dimension_numbers<[1], [1], [0], [0], [0, 0, 1, 0], [], []>} : vector<10x5xf32>, vector<128x5xf32>, vector<10x128xf32> -> vector<10x128xf32>
    %c0_3 = arith.constant 0 : index
    %c0_4 = arith.constant 0 : index
    %3 = vector.load %arg3[%c0_3, %c0_4] : memref<10x1xf32, #tpu.memory_space<vmem>>, vector<10x1xf32>
    %4 = vector.broadcast %3 : vector<10x1xf32> to vector<10x128xf32>
    %5 = arith.addf %2, %4 : vector<10x128xf32>
    %cst_5 = arith.constant 0.000000e+00 : f32
    %6 = vector.broadcast %cst_5 : f32 to vector<10x128xf32>
    %7 = arith.maximumf %5, %6 : vector<10x128xf32>
    %c0_6 = arith.constant 0 : index
    %c0_7 = arith.constant 0 : index
    %8 = vector.load %arg4[%c0_6, %c0_7] : memref<5x10xf32, #tpu.memory_space<vmem>>, vector<5x10xf32>
    %cst_8 = arith.constant dense<0.000000e+00> : vector<5x128xf32>
    %9 = tpu.matmul %8, %7, %cst_8 {dimension_numbers = #tpu.dot_dimension_numbers<[1], [0], [0], [1], [0, 0, 1, 1], [], []>} : vector<5x10xf32>, vector<10x128xf32>, vector<5x128xf32> -> vector<5x128xf32>
    %c0_9 = arith.constant 0 : index
    %c0_10 = arith.constant 0 : index
    %10 = vector.load %arg5[%c0_9, %c0_10] : memref<5x1xf32, #tpu.memory_space<vmem>>, vector<5x1xf32>
    %11 = vector.broadcast %10 : vector<5x1xf32> to vector<5x128xf32>
    %12 = arith.addf %9, %11 : vector<5x128xf32>
    %c0_11 = arith.constant 0 : index
    %c0_12 = arith.constant 0 : index
    %13 = vector.load %arg6[%c0_11, %c0_12] : memref<5x128xf32, #tpu.memory_space<vmem>>, vector<5x128xf32>
    tpu.vector_store %arg6[%c0_11, %c0_12], %12 {strides = array<i32>} : memref<5x128xf32, #tpu.memory_space<vmem>>, vector<5x128xf32>,
    return
  }
  func.func @transform_0(%arg0: i32) -> (i32, i32) {
    %c0_i32 = arith.constant 0 : i32
    %c0_i32_0 = arith.constant 0 : i32
    return %arg0, %c0_i32 : i32, i32
  }
  func.func @transform_1(%arg0: i32) -> (i32, i32) {
    %c0_i32 = arith.constant 0 : i32
    %c0_i32_0 = arith.constant 0 : i32
    %c0_i32_1 = arith.constant 0 : i32
    return %c0_i32, %c0_i32_0 : i32, i32
  }
  func.func @transform_2(%arg0: i32) -> (i32, i32) {
    %c0_i32 = arith.constant 0 : i32
    %c0_i32_0 = arith.constant 0 : i32
    %c0_i32_1 = arith.constant 0 : i32
    return %c0_i32, %c0_i32_0 : i32, i32
  }
  func.func @transform_3(%arg0: i32) -> (i32, i32) {
    %c0_i32 = arith.constant 0 : i32
    %c0_i32_0 = arith.constant 0 : i32
    %c0_i32_1 = arith.constant 0 : i32
    return %c0_i32, %c0_i32_0 : i32, i32
  }
  func.func @transform_4(%arg0: i32) -> (i32, i32) {
    %c0_i32 = arith.constant 0 : i32
    %c0_i32_0 = arith.constant 0 : i32
    %c0_i32_1 = arith.constant 0 : i32
    return %c0_i32, %c0_i32_0 : i32, i32
  }
  func.func @transform_5(%arg0: i32) -> (i32, i32) {
    %c0_i32 = arith.constant 0 : i32
    %c0_i32_0 = arith.constant 0 : i32
    return %c0_i32, %arg0 : i32, i32
  }
}

</mosaic_0001>

<llo_original>
// kernel: tpu_custom_call.1
$region0: #{tpu_custom_call.1}
  #allocation0 [shape = 'u32[]', space=smem, size = 0x4, offset = 0x4, fixed_abs, tag = 'smem constant byte address 0x4 - core index']
  #allocation1 [shape = 'u32[144,128]{1,0:T(1,128)}', space=vmem, size = 0x12000, scoped, tag = 'internal scratch']
  %s0 = inlined_call_operand.vmem [shape: f32[128,5], index: 0, kind: input, shape index: {}]
  %s1 = inlined_call_operand.vmem [shape: f32[10,5], index: 1, kind: input, shape index: {}]
  %s2 = inlined_call_operand.vmem [shape: f32[10,1], index: 2, kind: input, shape index: {}]
  %s3 = inlined_call_operand.vmem [shape: f32[5,10], index: 3, kind: input, shape index: {}]
  %s4 = inlined_call_operand.vmem [shape: f32[5,1], index: 4, kind: input, shape index: {}]
  %s5 = inlined_call_operand.hbm [shape: f32[5,128], index: 5, kind: output, shape index: {}]
  %s6 = sld [smem:[#allocation0]]
  $region30: #{tpu_custom_call.1} parent=0
    _
  %s8 = ssub.s32 1, %s6
  %s9 = scalar_select 0, %s8, %s6
  $region1: #{tpu_custom_call.1} parent=0
    #allocation2 [shape = 'u8[4096]{0}', space=vmem, size = 0x1000, scoped, tag = 'output window, operand 0, single buffered']
    #allocation3 [shape = 's32[1]{0}', space=sflag, size = 0x4, scoped, tag = 'scoped memory for tpu_custom_call.1']
    %10 = vsyncpa [#allocation3], 0
    // Predicated region
    $region2: #{tpu_custom_call.1} parent=1 // pred_check
      _
    $region3: #{tpu_custom_call.1} parent=1 // pred_check_branch
      %12 = sbr.rel (0) target = $region5
    $region4: #{tpu_custom_call.1} parent=1 // pred_region
      _
    $region5: #{tpu_custom_call.1} parent=1 // pred_fallthru
      _
    // Predicated region
    $region6: #{tpu_custom_call.1} parent=1 // pred_check
      _
    $region7: #{tpu_custom_call.1} parent=1 // pred_check_branch
      %14 = sbr.rel (0) target = $region9
    $region8: #{tpu_custom_call.1} parent=1 // pred_region
      _
    $region9: #{tpu_custom_call.1} parent=1 // pred_fallthru
      _
    // Predicated region
    $region10: #{tpu_custom_call.1} parent=1 // pred_check
      _
    $region11: #{tpu_custom_call.1} parent=1 // pred_check_branch
      %16 = sbr.rel (0) target = $region13
    $region12: #{tpu_custom_call.1} parent=1 // pred_region
      _
    $region13: #{tpu_custom_call.1} parent=1 // pred_fallthru
      _
    // Predicated region
    $region14: #{tpu_custom_call.1} parent=1 // pred_check
      _
    $region15: #{tpu_custom_call.1} parent=1 // pred_check_branch
      %18 = sbr.rel (0) target = $region17
    $region16: #{tpu_custom_call.1} parent=1 // pred_region
      _
    $region17: #{tpu_custom_call.1} parent=1 // pred_fallthru
      _
    // Predicated region
    $region18: #{tpu_custom_call.1} parent=1 // pred_check
      _
    $region19: #{tpu_custom_call.1} parent=1 // pred_check_branch
      %20 = sbr.rel (0) target = $region21
    $region20: #{tpu_custom_call.1} parent=1 // pred_region
      _
    $region21: #{tpu_custom_call.1} parent=1 // pred_fallthru
      _
    %v21 = vld [vmem:[%s1] sm:$0xff]
    %v22 = vld [vmem:[%s1 + $0x8] sm:$0x3]
    %v23 = vld [vmem:[%s0] sm:$0xff]
    %v24 = vld [vmem:[%s0 + $0x8] sm:$0xff]
    %v25 = vld [vmem:[%s0 + $0x10] sm:$0xff]
    %v26 = vld [vmem:[%s0 + $0x18] sm:$0xff]
    %v27 = vld [vmem:[%s0 + $0x20] sm:$0xff]
    %v28 = vld [vmem:[%s0 + $0x28] sm:$0xff]
    %v29 = vld [vmem:[%s0 + $0x30] sm:$0xff]
    %v30 = vld [vmem:[%s0 + $0x38] sm:$0xff]
    %v31 = vld [vmem:[%s0 + $0x40] sm:$0xff]
    %v32 = vld [vmem:[%s0 + $0x48] sm:$0xff]
    %v33 = vld [vmem:[%s0 + $0x50] sm:$0xff]
    %v34 = vld [vmem:[%s0 + $0x58] sm:$0xff]
    %v35 = vld [vmem:[%s0 + $0x60] sm:$0xff]
    %v36 = vld [vmem:[%s0 + $0x68] sm:$0xff]
    %v37 = vld [vmem:[%s0 + $0x70] sm:$0xff]
    %v38 = vld [vmem:[%s0 + $0x78] sm:$0xff]
    %v39 = vld [vmem:[%s2] sm:$0xff]
    %v40 = vld [vmem:[%s2 + $0x8] sm:$0x3]
    %42 = vset.pattern.permute.xlu0 0
    %43 = vperm.xlu0 %42, %v39
    %v44 = vpop.permute.xlu0 %43
    %47 = vset.pattern.permute.xlu0 0
    %48 = vperm.xlu0 %47, %v40
    %v49 = vpop.permute.xlu0 %48
    %vm51 = vcmask 39936
    %v53 = vsel %vm51, %v21, 0
    %v56 = vsel %vm51, %v22, 0
    %v59 = vsel %vm51, %v23, 0
    %v62 = vsel %vm51, %v24, 0
    %v65 = vsel %vm51, %v25, 0
    %v68 = vsel %vm51, %v26, 0
    %v71 = vsel %vm51, %v27, 0
    %v74 = vsel %vm51, %v28, 0
    %v77 = vsel %vm51, %v29, 0
    %v80 = vsel %vm51, %v30, 0
    %v83 = vsel %vm51, %v31, 0
    %v86 = vsel %vm51, %v32, 0
    %v89 = vsel %vm51, %v33, 0
    %v92 = vsel %vm51, %v34, 0
    %v95 = vsel %vm51, %v35, 0
    %v98 = vsel %vm51, %v36, 0
    %v101 = vsel %vm51, %v37, 0
    %v104 = vsel %vm51, %v38, 0
    %106 = vmatprep.subr.mxu0 0.0
    %107 = vmatpush1.xpose.msra.mxu0 %v59
    %108 = vmatprep.subr.mxu0 0.0
    %109 = vmatpush1.xpose.msra.mxu0 %v62
    %110 = vmatprep.subr.mxu0 0.0
    %111 = vmatpush1.xpose.msra.mxu0 %v65
    %112 = vmatprep.subr.mxu0 0.0
    %113 = vmatpush1.xpose.msra.mxu0 %v68
    %114 = vmatprep.subr.mxu0 0.0
    %115 = vmatpush1.xpose.msra.mxu0 %v71
    %116 = vmatprep.subr.mxu0 0.0
    %117 = vmatpush1.xpose.msra.mxu0 %v74
    %118 = vmatprep.subr.mxu0 0.0
    %119 = vmatpush1.xpose.msra.mxu0 %v77
    %120 = vmatprep.subr.mxu0 0.0
    %121 = vmatpush1.xpose.msra.mxu0 %v80
    %122 = vmatprep.subr.mxu0 0.0
    %123 = vmatpush1.xpose.msra.mxu0 %v83
    %124 = vmatprep.subr.mxu0 0.0
    %125 = vmatpush1.xpose.msra.mxu0 %v86
    %126 = vmatprep.subr.mxu0 0.0
    %127 = vmatpush1.xpose.msra.mxu0 %v89
    %128 = vmatprep.subr.mxu0 0.0
    %129 = vmatpush1.xpose.msra.mxu0 %v92
    %130 = vmatprep.subr.mxu0 0.0
    %131 = vmatpush1.xpose.msra.mxu0 %v95
    %132 = vmatprep.subr.mxu0 0.0
    %133 = vmatpush1.xpose.msra.mxu0 %v98
    %134 = vmatprep.subr.mxu0 0.0
    %135 = vmatpush1.xpose.msra.mxu0 %v101
    %136 = vmatprep.subr.mxu0 0.0
    %137 = vmatpush1.xpose.msra.mxu0 %v104
    %138 = vmatprep.subr.mxu0 0.0
    %139 = vmatpush1.xpose.msra.mxu0 0.0
    %140 = vmatprep.subr.mxu0 0.0
    %141 = vmatpush1.xpose.msra.mxu0 0.0
    %142 = vmatprep.subr.mxu0 0.0
    %143 = vmatpush1.xpose.msra.mxu0 0.0
    %144 = vmatprep.subr.mxu0 0.0
    %145 = vmatpush1.xpose.msra.mxu0 0.0
    %146 = vmatprep.subr.mxu0 0.0
    %147 = vmatpush1.xpose.msra.mxu0 0.0
    %148 = vmatprep.subr.mxu0 0.0
    %149 = vmatpush1.xpose.msra.mxu0 0.0
    %150 = vmatprep.subr.mxu0 0.0
    %151 = vmatpush1.xpose.msra.mxu0 0.0
    %152 = vmatprep.subr.mxu0 0.0
    %153 = vmatpush1.xpose.msra.mxu0 0.0
    %154 = vmatprep.subr.mxu0 0.0
    %155 = vmatpush1.xpose.msra.mxu0 0.0
    %156 = vmatprep.subr.mxu0 0.0
    %157 = vmatpush1.xpose.msra.mxu0 0.0
    %158 = vmatprep.subr.mxu0 0.0
    %159 = vmatpush1.xpose.msra.mxu0 0.0
    %160 = vmatprep.subr.mxu0 0.0
    %161 = vmatpush1.xpose.msra.mxu0 0.0
    %162 = vmatprep.subr.mxu0 0.0
    %163 = vmatpush1.xpose.msra.mxu0 0.0
    %164 = vmatprep.subr.mxu0 0.0
    %165 = vmatpush1.xpose.msra.mxu0 0.0
    %166 = vmatprep.subr.mxu0 0.0
    %167 = vmatpush1.xpose.msra.mxu0 0.0
    %168 = vmatprep.subr.mxu0 0.0
    %169 = vmatpush1.xpose.msra.mxu0 0.0
    %170 = vmatprep.mubr.f32.mxu0 0.0
    %171 = vmatmul.mubr.f32.gmra.mrb[0].mxu0 %v53
    %v172 = vpop.f32.mrb[0].mxu0
    %v173 = vadd.f32 %v44, %v172
    %v174 = vpop.f32.mrb[0].mxu0
    %175 = vmatprep.mubr.f32.mxu0 0.0
    %176 = vmatmul.mubr.f32.gmra.mrb[0].mxu0 %v56
    %v177 = vpop.f32.mrb[0].mxu0
    %v178 = vadd.f32 %v49, %v177
    %v179 = vpop.f32.mrb[0].mxu0
    %180 = vdwg.mxu0
    %v181 = vmax.f32 %v173, 0.0
    %v182 = vmax.f32 %v178, 0.0
    %v183 = vld [vmem:[%s3] sm:$0x1f]
    %v184 = vld [vmem:[%s4] sm:$0x1f]
    %186 = vset.pattern.permute.xlu0 0
    %187 = vperm.xlu0 %186, %v184
    %v188 = vpop.permute.xlu0 %187
    %vm190 = vcmask 80896
    %v192 = vsel %vm190, %v183, 0
    %vm194 = vcmask 1041408
    %v196 = vsel %vm194, %v182, 0
    %198 = vmatprep.subr.mxu0 0.0
    %199 = vmatpush1.msra.mxu0 %v181
    %200 = vmatprep.subr.mxu0 0.0
    %201 = vmatpush1.msra.mxu0 %v196
    %202 = vmatprep.subr.mxu0 0.0
    %203 = vmatpush1.msra.mxu0 0.0
    %204 = vmatprep.subr.mxu0 0.0
    %205 = vmatpush1.msra.mxu0 0.0
    %206 = vmatprep.subr.mxu0 0.0
    %207 = vmatpush1.msra.mxu0 0.0
    %208 = vmatprep.subr.mxu0 0.0
    %209 = vmatpush1.msra.mxu0 0.0
    %210 = vmatprep.subr.mxu0 0.0
    %211 = vmatpush1.msra.mxu0 0.0
    %212 = vmatprep.subr.mxu0 0.0
    %213 = vmatpush1.msra.mxu0 0.0
    %214 = vmatprep.subr.mxu0 0.0
    %215 = vmatpush1.msra.mxu0 0.0
    %216 = vmatprep.subr.mxu0 0.0
    %217 = vmatpush1.msra.mxu0 0.0
    %218 = vmatprep.subr.mxu0 0.0
    %219 = vmatpush1.msra.mxu0 0.0
    %220 = vmatprep.subr.mxu0 0.0
    %221 = vmatpush1.msra.mxu0 0.0
    %222 = vmatprep.subr.mxu0 0.0
    %223 = vmatpush1.msra.mxu0 0.0
    %224 = vmatprep.subr.mxu0 0.0
    %225 = vmatpush1.msra.mxu0 0.0
    %226 = vmatprep.subr.mxu0 0.0
    %227 = vmatpush1.msra.mxu0 0.0
    %228 = vmatprep.subr.mxu0 0.0
    %229 = vmatpush1.msra.mxu0 0.0
    %230 = vmatprep.subr.mxu0 0.0
    %231 = vmatpush1.msra.mxu0 0.0
    %232 = vmatprep.subr.mxu0 0.0
    %233 = vmatpush1.msra.mxu0 0.0
    %234 = vmatprep.subr.mxu0 0.0
    %235 = vmatpush1.msra.mxu0 0.0
    %236 = vmatprep.subr.mxu0 0.0
    %237 = vmatpush1.msra.mxu0 0.0
    %238 = vmatprep.subr.mxu0 0.0
    %239 = vmatpush1.msra.mxu0 0.0
    %240 = vmatprep.subr.mxu0 0.0
    %241 = vmatpush1.msra.mxu0 0.0
    %242 = vmatprep.subr.mxu0 0.0
    %243 = vmatpush1.msra.mxu0 0.0
    %244 = vmatprep.subr.mxu0 0.0
    %245 = vmatpush1.msra.mxu0 0.0
    %246 = vmatprep.subr.mxu0 0.0
    %247 = vmatpush1.msra.mxu0 0.0
    %248 = vmatprep.subr.mxu0 0.0
    %249 = vmatpush1.msra.mxu0 0.0
    %250 = vmatprep.subr.mxu0 0.0
    %251 = vmatpush1.msra.mxu0 0.0
    %252 = vmatprep.subr.mxu0 0.0
    %253 = vmatpush1.msra.mxu0 0.0
    %254 = vmatprep.subr.mxu0 0.0
    %255 = vmatpush1.msra.mxu0 0.0
    %256 = vmatprep.subr.mxu0 0.0
    %257 = vmatpush1.msra.mxu0 0.0
    %258 = vmatprep.subr.mxu0 0.0
    %259 = vmatpush1.msra.mxu0 0.0
    %260 = vmatprep.subr.mxu0 0.0
    %261 = vmatpush1.msra.mxu0 0.0
    %262 = vmatprep.mubr.f32.mxu0 0.0
    %263 = vmatmul.mubr.f32.gmra.mrb[0].mxu0 %v192
    %v264 = vpop.f32.mrb[0].mxu0
    %v265 = vadd.f32 %v188, %v264
    %v266 = vpop.f32.mrb[0].mxu0
    %267 = vdwg.mxu0
    %268 = vst [vmem:[#allocation2] sm:$0x1f] %v265
    // Predicated region
    $region22: #{tpu_custom_call.1} parent=1 // pred_check
      _
    $region23: #{tpu_custom_call.1} parent=1 // pred_check_branch
      %270 = sbr.rel (0) target = $region25
    $region24: #{tpu_custom_call.1} parent=1 // pred_region
      %s272 = ssub.s32 128, 128
      %273 = vsyncadd [#allocation3], %s272
      %s275 = sshll.u32 [#allocation2], 4
      %s276 = int_to_ptr.vmem [resolvable:$true] %s275
      %278 = dma.vmem_to_hbm [thread:$0]  %s276, 128, %s5, [#allocation3]
    $region25: #{tpu_custom_call.1} parent=1 // pred_fallthru
      _
    // Predicated region
    $region26: #{tpu_custom_call.1} parent=1 // pred_check
      _
    $region27: #{tpu_custom_call.1} parent=1 // pred_check_branch
      %280 = sbr.rel (0) target = $region29
    $region28: #{tpu_custom_call.1} parent=1 // pred_region
      %281 = dma.done [#allocation3], 128
    $region29: #{tpu_custom_call.1} parent=1 // pred_fallthru
      _
    %282 = vsyncpa [#allocation3], 1

</llo_original>
